<compile_context>
chip_gen: v7x
topology: tpu7x:2x2x1
jax: 0.10.0
libtpu: 0.0.40
codegen_flags: <defaults>
</compile_context>

<pallas_src>
import functools

import jax
import jax.numpy as jnp
from jax.experimental import pallas as pl
from jax.experimental.pallas import tpu as pltpu

TM_CAP = 1024                      # A_hat row tile cap
TK_CAP = 1024                      # A_hat column / reduction tile cap
Z_RESIDENT_CAP = 4 * 1024 * 1024   # keep Z fully VMEM-resident below this
A_SCALE = 127.0                    # A_hat in (0, 1] -> static int8 scale


def _round_up(x, m):
    return ((x + m - 1) // m) * m


def _vmem_limit_bytes():
    """Generation-aware scoped-VMEM budget (~3/4 of per-TC VMEM, capped)."""
    try:
        cap = int(pltpu.get_tpu_info().vmem_capacity_bytes)
    except Exception:
        cap = 64 * 1024 * 1024      # conservative (v7x per-TC) fallback
    return max(32 * 1024 * 1024, min(cap * 3 // 4, 96 * 1024 * 1024))


def _plan_tiles(n):
    """Return (n_pad, tm, tk): tiles are multiples of 128 dividing n_pad."""
    n_pad = _round_up(max(n, 1), 128)

    def fit(cap):
        t = min(cap, n_pad)
        while n_pad % t:
            t -= 128
        return t

    return n_pad, fit(TM_CAP), fit(TK_CAP)


def _pad2(a, r, c):
    return jnp.zeros((r, c), a.dtype).at[: a.shape[0], : a.shape[1]].set(a)


# ---------------------------------------------------------------------------
# Kernel 1: one GCN layer  H_out = relu(A_hat @ Z + b),  Z = H_in @ W hoisted.
# grid = (row tiles i [parallel], reduction tiles k [arbitrary])
# A is int8 (scale 1/127 folded into Z); accumulation in f32 VMEM scratch.
# ---------------------------------------------------------------------------
def _gcn_layer_kernel(a_ref, z_ref, b_ref, o_ref, acc_ref, *, tk, z_resident):
    k = pl.program_id(1)

    @pl.when(k == 0)
    def _():
        acc_ref[...] = jnp.zeros_like(acc_ref)

    if z_resident:
        row0 = pl.multiple_of(k * tk, tk)
        z = z_ref[pl.ds(row0, tk), :]          # resident Z: slice k-rows
    else:
        z = z_ref[...]                         # streamed (tk, hp) tile

    a_bf = a_ref[...].astype(jnp.bfloat16)      # int8 -> bf16 dequant (VPU)
    acc_ref[...] += jnp.dot(a_bf, z, preferred_element_type=jnp.float32)

    @pl.when(k == pl.num_programs(1) - 1)
    def _():
        # bias + ReLU hoisted out of the reduction loop.
        o_ref[...] = jnp.maximum(acc_ref[...] + b_ref[...], 0.0).astype(o_ref.dtype)
        # TODO(synk): training-mode dropout (pltpu.prng_* mask) not wired in;
        # eval-mode dropout is the identity.


def _gcn_layer(a_q, z, b, n_pad, tm, tk, hp, *, z_resident, vmem_limit):
    n_i, n_k = n_pad // tm, n_pad // tk
    if z_resident:
        z_spec = pl.BlockSpec((n_pad, hp), lambda i, k: (0, 0))   # DMA'd once
        z_bytes = n_pad * hp * 2
    else:
        z_spec = pl.BlockSpec((tk, hp), lambda i, k: (k, 0))
        z_bytes = n_pad * hp * 2 * n_i
    flops = 2 * n_pad * n_pad * hp
    bytes_accessed = n_pad * n_pad + z_bytes + n_pad * hp * 2 + hp * 4
    kernel = functools.partial(_gcn_layer_kernel, tk=tk, z_resident=z_resident)
    return pl.pallas_call(
        kernel,
        out_shape=jax.ShapeDtypeStruct((n_pad, hp), jnp.bfloat16),
        grid=(n_i, n_k),
        in_specs=[
            pl.BlockSpec((tm, tk), lambda i, k: (i, k)),   # A_hat int8 tile
            z_spec,                                        # Z (resident/stream)
            pl.BlockSpec((1, hp), lambda i, k: (0, 0)),    # bias (resident)
        ],
        out_specs=pl.BlockSpec((tm, hp), lambda i, k: (i, 0)),
        scratch_shapes=[pltpu.VMEM((tm, hp), jnp.float32)],
        compiler_params=pltpu.CompilerParams(
            dimension_semantics=("parallel", "arbitrary"),
            vmem_limit_bytes=vmem_limit),
        cost_estimate=pl.CostEstimate(flops=flops, transcendentals=0,
                                      bytes_accessed=int(bytes_accessed)),
    )(a_q, z, b)


# ---------------------------------------------------------------------------
# Kernel 2: global mean-pool + Linear + sigmoid
# pool is a 0/1 bf16 membership matrix; 1/count applied at finalize.
# grid = (reduction over node tiles,)   pooled accumulator lives in VMEM
# ---------------------------------------------------------------------------
def _pool_fc_kernel(pool_ref, h_ref, inv_ref, wfc_ref, bfc_ref, o_ref, acc_ref):
    k = pl.program_id(0)

    @pl.when(k == 0)
    def _():
        acc_ref[...] = jnp.zeros_like(acc_ref)

    acc_ref[...] += jnp.dot(pool_ref[...], h_ref[...],
                            preferred_element_type=jnp.float32)

    @pl.when(k == pl.num_programs(0) - 1)
    def _():
        pooled = acc_ref[...] * inv_ref[...]           # per-graph 1/count
        logits = jnp.dot(pooled, wfc_ref[...],
                         preferred_element_type=jnp.float32) + bfc_ref[...]
        o_ref[...] = jax.nn.sigmoid(logits)


def _pool_fc(pool, h2, inv, wfc, bfc, n_pad, tk, gp, hp, cp, vmem_limit):
    return pl.pallas_call(
        _pool_fc_kernel,
        out_shape=jax.ShapeDtypeStruct((gp, cp), jnp.float32),
        grid=(n_pad // tk,),
        in_specs=[
            pl.BlockSpec((gp, tk), lambda k: (0, k)),   # 0/1 pool cols (bf16)
            pl.BlockSpec((tk, hp), lambda k: (k, 0)),   # H2 k-rows (bf16)
            pl.BlockSpec((gp, 1), lambda k: (0, 0)),    # 1/count (resident)
            pl.BlockSpec((hp, cp), lambda k: (0, 0)),   # Wfc (resident)
            pl.BlockSpec((1, cp), lambda k: (0, 0)),    # bfc (resident)
        ],
        out_specs=pl.BlockSpec((gp, cp), lambda k: (0, 0)),
        scratch_shapes=[pltpu.VMEM((gp, hp), jnp.float32)],
        compiler_params=pltpu.CompilerParams(
            dimension_semantics=("arbitrary",),
            vmem_limit_bytes=vmem_limit),
    )(pool, h2, inv, wfc, bfc)


# ---------------------------------------------------------------------------
# Wrapper: build quantized normalized adjacency (single O(E) + one int8 scatter
# pass), hoist the per-layer feature transforms, run the Pallas pipeline.
# ---------------------------------------------------------------------------
def gcn_forward(x, edge_index, batch, params, num_graphs):
    w1, b1, w2, b2, wfc, bfc = params
    N, F = x.shape
    H = w1.shape[1]
    C = wfc.shape[1]

    n_pad, tm, tk = _plan_tiles(N)
    hp = _round_up(H, 128)
    gp = _round_up(max(num_graphs, 1), 8)
    cp = _round_up(C, 128)
    vmem_limit = _vmem_limit_bytes()
    z_resident = (n_pad * hp * 2) <= Z_RESIDENT_CAP
    inv_scale = jnp.float32(1.0 / A_SCALE)

    # A_hat = D^-1/2 (A + I) D^-1/2, values in (0, 1] -> int8 with scale 1/127.
    # Degrees via O(E) scatter; single scatter pass into the int8 buffer.
    src, dst = edge_index[0], edge_index[1]
    deg = jnp.ones((N,), jnp.float32).at[dst].add(1.0)      # self-loop + in-edges
    dinv = jax.lax.rsqrt(deg)
    eq = jnp.round(dinv[dst] * dinv[src] * A_SCALE).astype(jnp.int8)
    dq = jnp.round(dinv * dinv * A_SCALE).astype(jnp.int8)
    idx = jnp.arange(N)
    a_q = (jnp.zeros((n_pad, n_pad), jnp.int8)
           .at[dst, src].add(eq)
           .at[idx, idx].add(dq))              # padded rows/cols stay exactly 0

    # Lane-dense padded small operands (zero padding leaves results unchanged).
    w1_p = _pad2(w1.astype(jnp.float32), F, hp)
    w2_p = _pad2(w2.astype(jnp.float32), hp, hp)
    b1_p = _pad2(b1.reshape(1, -1).astype(jnp.float32), 1, hp)
    b2_p = _pad2(b2.reshape(1, -1).astype(jnp.float32), 1, hp)
    wfc_p = _pad2(wfc.astype(jnp.float32), hp, cp)
    bfc_p = _pad2(bfc.reshape(1, -1).astype(jnp.float32), 1, cp)

    # Layer 1: Z1 = X @ W1 hoisted (tiny XLA matmul); 1/127 dequant scale folded.
    x_p = _pad2(x.astype(jnp.float32), n_pad, F)
    z1 = (jnp.dot(x_p, w1_p) * inv_scale).astype(jnp.bfloat16)
    h1 = _gcn_layer(a_q, z1, b1_p, n_pad, tm, tk, hp,
                    z_resident=z_resident, vmem_limit=vmem_limit)

    # Layer 2: Z2 = H1 @ W2 hoisted.
    z2 = (jnp.dot(h1, w2_p.astype(jnp.bfloat16),
                  preferred_element_type=jnp.float32) * inv_scale
          ).astype(jnp.bfloat16)
    h2 = _gcn_layer(a_q, z2, b2_p, n_pad, tm, tk, hp,
                    z_resident=z_resident, vmem_limit=vmem_limit)

    # Mean pool: exact 0/1 membership in bf16; 1/count applied at finalize.
    onehot = (batch[None, :] == jnp.arange(num_graphs)[:, None]).astype(jnp.float32)
    counts = jnp.maximum(onehot.sum(axis=1, keepdims=True), 1.0)
    pool = _pad2(onehot, gp, n_pad).astype(jnp.bfloat16)     # padded cols exactly 0
    inv = _pad2(1.0 / counts, gp, 1)

    out = _pool_fc(pool, h2, inv, wfc_p, bfc_p, n_pad, tk, gp, hp, cp, vmem_limit)
    return out[:num_graphs, :C]


# Pure-JAX f32 reference (same forward semantics) for validation.
def gcn_reference(x, edge_index, batch, params, num_graphs):
    w1, b1, w2, b2, wfc, bfc = params
    N = x.shape[0]
    src, dst = edge_index[0], edge_index[1]
    a = jnp.zeros((N, N), jnp.float32).at[dst, src].add(1.0) + jnp.eye(N)
    deg = a.sum(axis=1)
    dinv = jnp.where(deg > 0, 1.0 / jnp.sqrt(deg), 0.0)
    a_hat = dinv[:, None] * a * dinv[None, :]
    h = jnp.maximum(a_hat @ (x @ w1) + b1.reshape(1, -1), 0.0)
    h = jnp.maximum(a_hat @ (h @ w2) + b2.reshape(1, -1), 0.0)
    onehot = (batch[None, :] == jnp.arange(num_graphs)[:, None]).astype(jnp.float32)
    pooled = (onehot @ h) / jnp.maximum(onehot.sum(1, keepdims=True), 1.0)
    return jax.nn.sigmoid(pooled @ wfc + bfc.reshape(1, -1))


if __name__ == "__main__":
    num_features, hidden_dim, num_classes = 1, 64, 1
    N, G = 8, 2  # 8 nodes total, 2 graphs of 4 nodes each

    key = jax.random.PRNGKey(0)
    k = jax.random.split(key, 4)

    x = jax.random.normal(k[0], (N, num_features), dtype=jnp.float32)

    # Undirected ring within each graph (both directions listed).
    src = jnp.array([0, 1, 1, 2, 2, 3, 3, 0, 4, 5, 5, 6, 6, 7, 7, 4], jnp.int32)
    dst = jnp.array([1, 0, 2, 1, 3, 2, 0, 3, 5, 4, 6, 5, 7, 6, 4, 7], jnp.int32)
    edge_index = jnp.stack([src, dst])
    batch = jnp.array([0, 0, 0, 0, 1, 1, 1, 1], jnp.int32)

    def glorot(kk, shape):
        fan_in, fan_out = shape
        lim = jnp.sqrt(6.0 / (fan_in + fan_out))
        return jax.random.uniform(kk, shape, jnp.float32, -lim, lim)

    w1 = glorot(k[1], (num_features, hidden_dim))
    b1 = jnp.zeros((hidden_dim,), jnp.float32)
    w2 = glorot(k[2], (hidden_dim, hidden_dim))
    b2 = jnp.zeros((hidden_dim,), jnp.float32)
    wfc = glorot(k[3], (hidden_dim, num_classes))  # stored transposed: x @ Wfc + b
    bfc = jnp.zeros((num_classes,), jnp.float32)
    params = (w1, b1, w2, b2, wfc, bfc)

    out = gcn_forward(x, edge_index, batch, params, G)
    jax.block_until_ready(out)
    assert out.shape == (G, num_classes)

    ref = gcn_reference(x, edge_index, batch, params, G)
    max_err = float(jnp.max(jnp.abs(out - ref)))
    assert max_err < 5e-2, f"mismatch vs reference: {max_err}"

    print("KERNEL_OK")
</pallas_src>

<mosaic_0001>
module attributes {stable_mosaic.version = 11 : i64} {
  func.func @_gcn_layer_kernel(%arg0: i32, %arg1: i32, %arg2: memref<128x128xi8, #tpu.memory_space<vmem>>, %arg3: memref<128x128xbf16, #tpu.memory_space<vmem>>, %arg4: memref<1x128xf32, #tpu.memory_space<vmem>>, %arg5: memref<128x128xbf16, #tpu.memory_space<vmem>>, %arg6: memref<128x128xf32, #tpu.memory_space<vmem>>) attributes {dimension_semantics = [#tpu.dimension_semantics<parallel>, #tpu.dimension_semantics<arbitrary>], iteration_bounds = array<i64: 1, 1>, scalar_prefetch = 0 : i64, scratch_operands = 1 : i64, tpu.core_type = #tpu.core_type<tc>, window_params = [{transform_indices = @transform_0, window_bounds = array<i64: 128, 128>}, {pipeline_mode = #tpu.pipeline_mode<synchronous>, transform_indices = @transform_1, window_bounds = array<i64: 128, 128>}, {pipeline_mode = #tpu.pipeline_mode<synchronous>, transform_indices = @transform_2, window_bounds = array<i64: 1, 128>}, {transform_indices = @transform_3, window_bounds = array<i64: 128, 128>}]} {
    %c0_i32 = arith.constant 0 : i32
    %0 = arith.cmpi eq, %arg1, %c0_i32 : i32
    %1 = arith.extui %0 : i1 to i32
    %c0_i32_0 = arith.constant 0 : i32
    %2 = arith.cmpi ne, %1, %c0_i32_0 : i32
    scf.if %2 {
      %cst_9 = arith.constant 0.000000e+00 : f32
      %16 = vector.broadcast %cst_9 : f32 to vector<128x128xf32>
      %c0_10 = arith.constant 0 : index
      %c0_11 = arith.constant 0 : index
      %17 = vector.load %arg6[%c0_10, %c0_11] : memref<128x128xf32, #tpu.memory_space<vmem>>, vector<128x128xf32>
      tpu.vector_store %arg6[%c0_10, %c0_11], %16 {strides = array<i32>} : memref<128x128xf32, #tpu.memory_space<vmem>>, vector<128x128xf32>,
    } else {
    }
    %c128_i32 = arith.constant 128 : i32
    %3 = arith.muli %arg1, %c128_i32 : i32
    %4 = tpu.assume_multiple %3, 128 : i32
    %5 = arith.index_cast %4 : i32 to index
    %c0 = arith.constant 0 : index
    %6 = vector.load %arg3[%5, %c0] : memref<128x128xbf16, #tpu.memory_space<vmem>>, vector<128x128xbf16>
    %c0_1 = arith.constant 0 : index
    %c0_2 = arith.constant 0 : index
    %7 = vector.load %arg2[%c0_1, %c0_2] : memref<128x128xi8, #tpu.memory_space<vmem>>, vector<128x128xi8>
    %8 = arith.sitofp %7 : vector<128x128xi8> to vector<128x128xbf16>
    %c0_3 = arith.constant 0 : index
    %c0_4 = arith.constant 0 : index
    %9 = vector.load %arg6[%c0_3, %c0_4] : memref<128x128xf32, #tpu.memory_space<vmem>>, vector<128x128xf32>
    %cst = arith.constant dense<0.000000e+00> : vector<128x128xf32>
    %10 = tpu.matmul %8, %6, %cst {dimension_numbers = #tpu.dot_dimension_numbers<[1], [0], [0], [1], [0, 0, 1, 1], [], []>} : vector<128x128xbf16>, vector<128x128xbf16>, vector<128x128xf32> -> vector<128x128xf32>
    %11 = arith.addf %9, %10 : vector<128x128xf32>
    %c0_5 = arith.constant 0 : index
    %c0_6 = arith.constant 0 : index
    %12 = vector.load %arg6[%c0_5, %c0_6] : memref<128x128xf32, #tpu.memory_space<vmem>>, vector<128x128xf32>
    tpu.vector_store %arg6[%c0_5, %c0_6], %11 {strides = array<i32>} : memref<128x128xf32, #tpu.memory_space<vmem>>, vector<128x128xf32>,
    %c0_i32_7 = arith.constant 0 : i32
    %13 = arith.cmpi eq, %arg1, %c0_i32_7 : i32
    %14 = arith.extui %13 : i1 to i32
    %c0_i32_8 = arith.constant 0 : i32
    %15 = arith.cmpi ne, %14, %c0_i32_8 : i32
    scf.if %15 {
      %c0_9 = arith.constant 0 : index
      %c0_10 = arith.constant 0 : index
      %16 = vector.load %arg6[%c0_9, %c0_10] : memref<128x128xf32, #tpu.memory_space<vmem>>, vector<128x128xf32>
      %c0_11 = arith.constant 0 : index
      %c0_12 = arith.constant 0 : index
      %17 = vector.load %arg4[%c0_11, %c0_12] : memref<1x128xf32, #tpu.memory_space<vmem>>, vector<1x128xf32>
      %18 = vector.broadcast %17 : vector<1x128xf32> to vector<128x128xf32>
      %19 = arith.addf %16, %18 : vector<128x128xf32>
      %cst_13 = arith.constant 0.000000e+00 : f32
      %20 = vector.broadcast %cst_13 : f32 to vector<128x128xf32>
      %21 = arith.maximumf %19, %20 : vector<128x128xf32>
      %22 = arith.truncf %21 : vector<128x128xf32> to vector<128x128xbf16>
      %c0_14 = arith.constant 0 : index
      %c0_15 = arith.constant 0 : index
      %23 = vector.load %arg5[%c0_14, %c0_15] : memref<128x128xbf16, #tpu.memory_space<vmem>>, vector<128x128xbf16>
      tpu.vector_store %arg5[%c0_14, %c0_15], %22 {strides = array<i32>} : memref<128x128xbf16, #tpu.memory_space<vmem>>, vector<128x128xbf16>,
    } else {
    }
    return
  }
  func.func @transform_0(%arg0: i32, %arg1: i32) -> (i32, i32) {
    %c0_i32 = arith.constant 0 : i32
    return %arg0, %arg1 : i32, i32
  }
  func.func @transform_1(%arg0: i32, %arg1: i32) -> (i32, i32) {
    %c0_i32 = arith.constant 0 : i32
    %c0_i32_0 = arith.constant 0 : i32
    %c0_i32_1 = arith.constant 0 : i32
    return %c0_i32, %c0_i32_0 : i32, i32
  }
  func.func @transform_2(%arg0: i32, %arg1: i32) -> (i32, i32) {
    %c0_i32 = arith.constant 0 : i32
    %c0_i32_0 = arith.constant 0 : i32
    %c0_i32_1 = arith.constant 0 : i32
    return %c0_i32, %c0_i32_0 : i32, i32
  }
  func.func @transform_3(%arg0: i32, %arg1: i32) -> (i32, i32) {
    %c0_i32 = arith.constant 0 : i32
    %c0_i32_0 = arith.constant 0 : i32
    return %arg0, %c0_i32 : i32, i32
  }
}

</mosaic_0001>

<llo_original>
// kernel: tpu_custom_call.1
$region0: #{tpu_custom_call.1}
  #allocation0 [shape = 'u32[]', space=smem, size = 0x4, offset = 0x4, fixed_abs, tag = 'smem constant byte address 0x4 - core index']
  #allocation1 [shape = 'u32[144,128]{1,0:T(1,128)}', space=vmem, size = 0x12000, scoped, tag = 'internal scratch']
  #allocation2 [shape = 'f32[128,128]{1,0:T(8,128)}', space=vmem, size = 0x10000, scoped, tag = 'scratch operand']
  %s0 = inlined_call_operand.hbm [shape: s8[128,128], index: 0, kind: input, shape index: {}]
  %s1 = inlined_call_operand.hbm [shape: bf16[128,128], index: 1, kind: input, shape index: {}]
  %s2 = inlined_call_operand.vmem [shape: f32[1,128], index: 2, kind: input, shape index: {}]
  %s3 = inlined_call_operand.hbm [shape: bf16[128,128], index: 3, kind: output, shape index: {}]
  %s4 = sld [smem:[#allocation0]]
  $region38: #{tpu_custom_call.1} parent=0
    _
  %s6 = ssub.s32 1, %s4
  %s7 = scalar_select 0, %s6, %s4
  $region1: #{tpu_custom_call.1} parent=0
    #allocation3 [shape = 'u8[16384]{0}', space=vmem, size = 0x4000, scoped, tag = 'input window, operand 0, single buffered']
    #allocation4 [shape = 's32[1]{0}', space=sflag, size = 0x4, scoped, tag = 'scoped memory for tpu_custom_call.1']
    #allocation5 [shape = 's32[1]{0}', space=sflag, size = 0x4, scoped, tag = 'scoped memory for tpu_custom_call.1']
    #allocation6 [shape = 'u8[32768]{0}', space=vmem, size = 0x8000, scoped, tag = 'input window, operand 1, single buffered']
    #allocation7 [shape = 's32[1]{0}', space=sflag, size = 0x4, scoped, tag = 'scoped memory for tpu_custom_call.1']
    #allocation8 [shape = 'u8[32768]{0}', space=vmem, size = 0x8000, scoped, tag = 'output window, operand 0, single buffered']
    %8 = vsyncpa [#allocation4], 0
    %9 = vsyncpa [#allocation7], 0
    %10 = vsyncpa [#allocation5], 0
    // Predicated region
    $region2: #{tpu_custom_call.1} parent=1 // pred_check
      _
    $region3: #{tpu_custom_call.1} parent=1 // pred_check_branch
      %12 = sbr.rel (0) target = $region5
    $region4: #{tpu_custom_call.1} parent=1 // pred_region
      %s14 = ssub.s32 512, 512
      %15 = vsyncadd [#allocation4], %s14
      %s16 = sshll.u32 [#allocation3], 4
      %s17 = int_to_ptr.vmem [resolvable:$true] %s16
      %22 = dma.hbm_to_vmem [thread:$0]  %s0, 512, %s17, [#allocation4], 128, 128, 8
    $region5: #{tpu_custom_call.1} parent=1 // pred_fallthru
      _
    // Predicated region
    $region6: #{tpu_custom_call.1} parent=1 // pred_check
      _
    $region7: #{tpu_custom_call.1} parent=1 // pred_check_branch
      %24 = sbr.rel (0) target = $region9
    $region8: #{tpu_custom_call.1} parent=1 // pred_region
      %s26 = ssub.s32 1024, 1024
      %27 = vsyncadd [#allocation7], %s26
      %s28 = sshll.u32 [#allocation6], 4
      %s29 = int_to_ptr.vmem [resolvable:$true] %s28
      %34 = dma.hbm_to_vmem [thread:$0]  %s1, 1024, %s29, [#allocation7], 64, 64, 4
    $region9: #{tpu_custom_call.1} parent=1 // pred_fallthru
      _
    // Predicated region
    $region10: #{tpu_custom_call.1} parent=1 // pred_check
      _
    $region11: #{tpu_custom_call.1} parent=1 // pred_check_branch
      %36 = sbr.rel (0) target = $region13
    $region12: #{tpu_custom_call.1} parent=1 // pred_region
      _
    $region13: #{tpu_custom_call.1} parent=1 // pred_fallthru
      _
    // Predicated region
    $region14: #{tpu_custom_call.1} parent=1 // pred_check
      _
    $region15: #{tpu_custom_call.1} parent=1 // pred_check_branch
      %38 = sbr.rel (0) target = $region17
    $region16: #{tpu_custom_call.1} parent=1 // pred_region
      %39 = dma.done [#allocation4], 512
    $region17: #{tpu_custom_call.1} parent=1 // pred_fallthru
      _
    // Predicated region
    $region18: #{tpu_custom_call.1} parent=1 // pred_check
      _
    $region19: #{tpu_custom_call.1} parent=1 // pred_check_branch
      %41 = sbr.rel (0) target = $region21
    $region20: #{tpu_custom_call.1} parent=1 // pred_region
      %42 = dma.done [#allocation7], 1024
    $region21: #{tpu_custom_call.1} parent=1 // pred_fallthru
      _
    %p44 = scmp.eq.s32.totalorder 0, 0
    // Predicated region
    $region22: #{tpu_custom_call.1} parent=1 // pred_check
      %p45 = pneg %p44
    $region23: #{tpu_custom_call.1} parent=1 // pred_check_branch
      %47 = sbr.rel (%p45) target = $region25
    $region24: #{tpu_custom_call.1} parent=1 // pred_region
      %48 = vst [vmem:[#allocation2] sm:$0xff] 0.0
      %49 = vst [vmem:[#allocation2 + $0x8] sm:$0xff] 0.0
      %50 = vst [vmem:[#allocation2 + $0x10] sm:$0xff] 0.0
      %51 = vst [vmem:[#allocation2 + $0x18] sm:$0xff] 0.0
      %52 = vst [vmem:[#allocation2 + $0x20] sm:$0xff] 0.0
      %53 = vst [vmem:[#allocation2 + $0x28] sm:$0xff] 0.0
      %54 = vst [vmem:[#allocation2 + $0x30] sm:$0xff] 0.0
      %55 = vst [vmem:[#allocation2 + $0x38] sm:$0xff] 0.0
      %56 = vst [vmem:[#allocation2 + $0x40] sm:$0xff] 0.0
      %57 = vst [vmem:[#allocation2 + $0x48] sm:$0xff] 0.0
      %58 = vst [vmem:[#allocation2 + $0x50] sm:$0xff] 0.0
      %59 = vst [vmem:[#allocation2 + $0x58] sm:$0xff] 0.0
      %60 = vst [vmem:[#allocation2 + $0x60] sm:$0xff] 0.0
      %61 = vst [vmem:[#allocation2 + $0x68] sm:$0xff] 0.0
      %62 = vst [vmem:[#allocation2 + $0x70] sm:$0xff] 0.0
      %63 = vst [vmem:[#allocation2 + $0x78] sm:$0xff] 0.0
    $region25: #{tpu_custom_call.1} parent=1 // pred_fallthru
      _
    %s64 = smul.u32 0, 128
    %s65 = sshra.s32 %s64, 3
    %s66 = sand.u32 %s64, 7
    %s67 = smul.addr %s65, 4
    %s68 = scalar_lea.vmem [#allocation6], %s67
    %v69 = vld [vmem:[%s68] sm:$0xf]
    %v70 = vld [vmem:[%s68 + $0x4] sm:$0xf]
    %v71 = vld [vmem:[%s68 + $0x8] sm:$0xf]
    %v72 = vld [vmem:[%s68 + $0xc] sm:$0xf]
    %v73 = vld [vmem:[%s68 + $0x10] sm:$0xf]
    %v74 = vld [vmem:[%s68 + $0x14] sm:$0xf]
    %v75 = vld [vmem:[%s68 + $0x18] sm:$0xf]
    %v76 = vld [vmem:[%s68 + $0x1c] sm:$0xf]
    %v77 = vld [vmem:[%s68 + $0x20] sm:$0xf]
    %v78 = vld [vmem:[%s68 + $0x24] sm:$0xf]
    %v79 = vld [vmem:[%s68 + $0x28] sm:$0xf]
    %v80 = vld [vmem:[%s68 + $0x2c] sm:$0xf]
    %v81 = vld [vmem:[%s68 + $0x30] sm:$0xf]
    %v82 = vld [vmem:[%s68 + $0x34] sm:$0xf]
    %v83 = vld [vmem:[%s68 + $0x38] sm:$0xf]
    %v84 = vld [vmem:[%s68 + $0x3c] sm:$0xf]
    %v85 = vld [vmem:[#allocation3] sm:$0xff]
    %v86 = vld [vmem:[#allocation3 + $0x8] sm:$0xff]
    %v87 = vld [vmem:[#allocation3 + $0x10] sm:$0xff]
    %v88 = vld [vmem:[#allocation3 + $0x18] sm:$0xff]
    %v89 = vunpack.c.l.s8.bf16 %v85
    %v90 = vunpack.c.h.s8.bf16 %v85
    %v91 = vunpack.c.l.s8.bf16 %v86
    %v92 = vunpack.c.h.s8.bf16 %v86
    %v93 = vunpack.c.l.s8.bf16 %v87
    %v94 = vunpack.c.h.s8.bf16 %v87
    %v95 = vunpack.c.l.s8.bf16 %v88
    %v96 = vunpack.c.h.s8.bf16 %v88
    %v97 = vld [vmem:[#allocation2] sm:$0xff]
    %v98 = vld [vmem:[#allocation2 + $0x8] sm:$0xff]
    %v99 = vld [vmem:[#allocation2 + $0x10] sm:$0xff]
    %v100 = vld [vmem:[#allocation2 + $0x18] sm:$0xff]
    %v101 = vld [vmem:[#allocation2 + $0x20] sm:$0xff]
    %v102 = vld [vmem:[#allocation2 + $0x28] sm:$0xff]
    %v103 = vld [vmem:[#allocation2 + $0x30] sm:$0xff]
    %v104 = vld [vmem:[#allocation2 + $0x38] sm:$0xff]
    %v105 = vld [vmem:[#allocation2 + $0x40] sm:$0xff]
    %v106 = vld [vmem:[#allocation2 + $0x48] sm:$0xff]
    %v107 = vld [vmem:[#allocation2 + $0x50] sm:$0xff]
    %v108 = vld [vmem:[#allocation2 + $0x58] sm:$0xff]
    %v109 = vld [vmem:[#allocation2 + $0x60] sm:$0xff]
    %v110 = vld [vmem:[#allocation2 + $0x68] sm:$0xff]
    %v111 = vld [vmem:[#allocation2 + $0x70] sm:$0xff]
    %v112 = vld [vmem:[#allocation2 + $0x78] sm:$0xff]
    %v129 = vunpack.c.l.b16 %v69
    %v130 = vunpack.c.l.b16 %v70
    %v131 = vunpack.c.l.b16 %v71
    %v132 = vunpack.c.l.b16 %v72
    %v133 = vunpack.c.l.b16 %v73
    %v134 = vunpack.c.l.b16 %v74
    %v135 = vunpack.c.l.b16 %v75
    %v136 = vunpack.c.l.b16 %v76
    %v137 = vunpack.c.l.b16 %v77
    %v138 = vunpack.c.l.b16 %v78
    %v139 = vunpack.c.l.b16 %v79
    %v140 = vunpack.c.l.b16 %v80
    %v141 = vunpack.c.l.b16 %v81
    %v142 = vunpack.c.l.b16 %v82
    %v143 = vunpack.c.l.b16 %v83
    %v144 = vunpack.c.l.b16 %v84
    %v145 = vpack.c.b16 %v130, %v129
    %v146 = vpack.c.b16 %v132, %v131
    %v147 = vpack.c.b16 %v134, %v133
    %v148 = vpack.c.b16 %v136, %v135
    %v149 = vpack.c.b16 %v138, %v137
    %v150 = vpack.c.b16 %v140, %v139
    %v151 = vpack.c.b16 %v142, %v141
    %v152 = vpack.c.b16 %v144, %v143
    %161 = vmatprep.subr.bf16.mxu0 0
    %162 = vmatpush1.bf16.msra.mxu0 %v145
    %163 = vmatprep.subr.bf16.mxu0 0
    %164 = vmatpush1.bf16.msra.mxu0 %v146
    %165 = vmatprep.subr.bf16.mxu0 0
    %166 = vmatpush1.bf16.msra.mxu0 %v147
    %167 = vmatprep.subr.bf16.mxu0 0
    %168 = vmatpush1.bf16.msra.mxu0 %v148
    %169 = vmatprep.subr.bf16.mxu0 0
    %170 = vmatpush1.bf16.msra.mxu0 %v149
    %171 = vmatprep.subr.bf16.mxu0 0
    %172 = vmatpush1.bf16.msra.mxu0 %v150
    %173 = vmatprep.subr.bf16.mxu0 0
    %174 = vmatpush1.bf16.msra.mxu0 %v151
    %175 = vmatprep.subr.bf16.mxu0 0
    %176 = vmatpush1.bf16.msra.mxu0 %v152
    %177 = vmatprep.subr.bf16.mxu0 0
    %178 = vmatpush1.bf16.msra.mxu0 0
    %179 = vmatprep.subr.bf16.mxu0 0
    %180 = vmatpush1.bf16.msra.mxu0 0
    %181 = vmatprep.subr.bf16.mxu0 0
    %182 = vmatpush1.bf16.msra.mxu0 0
    %183 = vmatprep.subr.bf16.mxu0 0
    %184 = vmatpush1.bf16.msra.mxu0 0
    %185 = vmatprep.subr.bf16.mxu0 0
    %186 = vmatpush1.bf16.msra.mxu0 0
    %187 = vmatprep.subr.bf16.mxu0 0
    %188 = vmatpush1.bf16.msra.mxu0 0
    %189 = vmatprep.subr.bf16.mxu0 0
    %190 = vmatpush1.bf16.msra.mxu0 0
    %191 = vmatprep.subr.bf16.mxu0 0
    %192 = vmatpush1.bf16.msra.mxu0 0
    %193 = vmatprep.mubr.bf16.mxu0 0
    %194 = vmatmul.mubr.bf16.gmra.mrb[0].mxu0 %v89
    %v195 = vpop.f32.mrb[0].mxu0
    %v196 = vadd.f32 0.0, %v195
    %v197 = vpop.f32.mrb[0].mxu0
    %v198 = vpop.f32.mrb[0].mxu0
    %v199 = vadd.f32 0.0, %v198
    %v200 = vpop.f32.mrb[0].mxu0
    %201 = vmatprep.mubr.bf16.mxu0 0
    %202 = vmatmul.mubr.bf16.gmra.mrb[0].mxu0 %v90
    %v203 = vpop.f32.mrb[0].mxu0
    %v204 = vadd.f32 0.0, %v203
    %v205 = vpop.f32.mrb[0].mxu0
    %v206 = vpop.f32.mrb[0].mxu0
    %v207 = vadd.f32 0.0, %v206
    %v208 = vpop.f32.mrb[0].mxu0
    %209 = vmatprep.mubr.bf16.mxu0 0
    %210 = vmatmul.mubr.bf16.gmra.mrb[0].mxu0 %v91
    %v211 = vpop.f32.mrb[0].mxu0
    %v212 = vadd.f32 0.0, %v211
    %v213 = vpop.f32.mrb[0].mxu0
    %v214 = vpop.f32.mrb[0].mxu0
    %v215 = vadd.f32 0.0, %v214
    %v216 = vpop.f32.mrb[0].mxu0
    %217 = vmatprep.mubr.bf16.mxu0 0
    %218 = vmatmul.mubr.bf16.gmra.mrb[0].mxu0 %v92
    %v219 = vpop.f32.mrb[0].mxu0
    %v220 = vadd.f32 0.0, %v219
    %v221 = vpop.f32.mrb[0].mxu0
    %v222 = vpop.f32.mrb[0].mxu0
    %v223 = vadd.f32 0.0, %v222
    %v224 = vpop.f32.mrb[0].mxu0
    %225 = vmatprep.mubr.bf16.mxu0 0
    %226 = vmatmul.mubr.bf16.gmra.mrb[0].mxu0 %v93
    %v227 = vpop.f32.mrb[0].mxu0
    %v228 = vadd.f32 0.0, %v227
    %v229 = vpop.f32.mrb[0].mxu0
    %v230 = vpop.f32.mrb[0].mxu0
    %v231 = vadd.f32 0.0, %v230
    %v232 = vpop.f32.mrb[0].mxu0
    %233 = vmatprep.mubr.bf16.mxu0 0
    %234 = vmatmul.mubr.bf16.gmra.mrb[0].mxu0 %v94
    %v235 = vpop.f32.mrb[0].mxu0
    %v236 = vadd.f32 0.0, %v235
    %v237 = vpop.f32.mrb[0].mxu0
    %v238 = vpop.f32.mrb[0].mxu0
    %v239 = vadd.f32 0.0, %v238
    %v240 = vpop.f32.mrb[0].mxu0
    %241 = vmatprep.mubr.bf16.mxu0 0
    %242 = vmatmul.mubr.bf16.gmra.mrb[0].mxu0 %v95
    %v243 = vpop.f32.mrb[0].mxu0
    %v244 = vadd.f32 0.0, %v243
    %v245 = vpop.f32.mrb[0].mxu0
    %v246 = vpop.f32.mrb[0].mxu0
    %v247 = vadd.f32 0.0, %v246
    %v248 = vpop.f32.mrb[0].mxu0
    %249 = vmatprep.mubr.bf16.mxu0 0
    %250 = vmatmul.mubr.bf16.gmra.mrb[0].mxu0 %v96
    %v251 = vpop.f32.mrb[0].mxu0
    %v252 = vadd.f32 0.0, %v251
    %v253 = vpop.f32.mrb[0].mxu0
    %v254 = vpop.f32.mrb[0].mxu0
    %v255 = vadd.f32 0.0, %v254
    %v256 = vpop.f32.mrb[0].mxu0
    %257 = vdwg.mxu0
    %v258 = vadd.f32 %v97, %v196
    %v259 = vadd.f32 %v98, %v199
    %v260 = vadd.f32 %v99, %v204
    %v261 = vadd.f32 %v100, %v207
    %v262 = vadd.f32 %v101, %v212
    %v263 = vadd.f32 %v102, %v215
    %v264 = vadd.f32 %v103, %v220
    %v265 = vadd.f32 %v104, %v223
    %v266 = vadd.f32 %v105, %v228
    %v267 = vadd.f32 %v106, %v231
    %v268 = vadd.f32 %v107, %v236
    %v269 = vadd.f32 %v108, %v239
    %v270 = vadd.f32 %v109, %v244
    %v271 = vadd.f32 %v110, %v247
    %v272 = vadd.f32 %v111, %v252
    %v273 = vadd.f32 %v112, %v255
    %274 = vst [vmem:[#allocation2] sm:$0xff] %v258
    %275 = vst [vmem:[#allocation2 + $0x8] sm:$0xff] %v259
    %276 = vst [vmem:[#allocation2 + $0x10] sm:$0xff] %v260
    %277 = vst [vmem:[#allocation2 + $0x18] sm:$0xff] %v261
    %278 = vst [vmem:[#allocation2 + $0x20] sm:$0xff] %v262
    %279 = vst [vmem:[#allocation2 + $0x28] sm:$0xff] %v263
    %280 = vst [vmem:[#allocation2 + $0x30] sm:$0xff] %v264
    %281 = vst [vmem:[#allocation2 + $0x38] sm:$0xff] %v265
    %282 = vst [vmem:[#allocation2 + $0x40] sm:$0xff] %v266
    %283 = vst [vmem:[#allocation2 + $0x48] sm:$0xff] %v267
    %284 = vst [vmem:[#allocation2 + $0x50] sm:$0xff] %v268
    %285 = vst [vmem:[#allocation2 + $0x58] sm:$0xff] %v269
    %286 = vst [vmem:[#allocation2 + $0x60] sm:$0xff] %v270
    %287 = vst [vmem:[#allocation2 + $0x68] sm:$0xff] %v271
    %288 = vst [vmem:[#allocation2 + $0x70] sm:$0xff] %v272
    %289 = vst [vmem:[#allocation2 + $0x78] sm:$0xff] %v273
    // Predicated region
    $region26: #{tpu_custom_call.1} parent=1 // pred_check
      %p290 = pneg %p44
    $region27: #{tpu_custom_call.1} parent=1 // pred_check_branch
      %292 = sbr.rel (%p290) target = $region29
    $region28: #{tpu_custom_call.1} parent=1 // pred_region
      %v293 = vld [vmem:[#allocation2] sm:$0xff]
      %v294 = vld [vmem:[#allocation2 + $0x8] sm:$0xff]
      %v295 = vld [vmem:[#allocation2 + $0x10] sm:$0xff]
      %v296 = vld [vmem:[#allocation2 + $0x18] sm:$0xff]
      %v297 = vld [vmem:[#allocation2 + $0x20] sm:$0xff]
      %v298 = vld [vmem:[#allocation2 + $0x28] sm:$0xff]
      %v299 = vld [vmem:[#allocation2 + $0x30] sm:$0xff]
      %v300 = vld [vmem:[#allocation2 + $0x38] sm:$0xff]
      %v301 = vld [vmem:[#allocation2 + $0x40] sm:$0xff]
      %v302 = vld [vmem:[#allocation2 + $0x48] sm:$0xff]
      %v303 = vld [vmem:[#allocation2 + $0x50] sm:$0xff]
      %v304 = vld [vmem:[#allocation2 + $0x58] sm:$0xff]
      %v305 = vld [vmem:[#allocation2 + $0x60] sm:$0xff]
      %v306 = vld [vmem:[#allocation2 + $0x68] sm:$0xff]
      %v307 = vld [vmem:[#allocation2 + $0x70] sm:$0xff]
      %v308 = vld [vmem:[#allocation2 + $0x78] sm:$0xff]
      %v309 = vld [vmem:[%s2] sm:$0x1]
      %v311 = vlaneseq
      %v312 = vshrl.u32 %v311, 7
      %v313 = vsub.s32 0, %v312
      %v314 = vrot.slane %v309, %v313
      %v316 = vadd.f32 %v293, %v314
      %v317 = vadd.f32 %v294, %v314
      %v318 = vadd.f32 %v295, %v314
      %v319 = vadd.f32 %v296, %v314
      %v320 = vadd.f32 %v297, %v314
      %v321 = vadd.f32 %v298, %v314
      %v322 = vadd.f32 %v299, %v314
      %v323 = vadd.f32 %v300, %v314
      %v324 = vadd.f32 %v301, %v314
      %v325 = vadd.f32 %v302, %v314
      %v326 = vadd.f32 %v303, %v314
      %v327 = vadd.f32 %v304, %v314
      %v328 = vadd.f32 %v305, %v314
      %v329 = vadd.f32 %v306, %v314
      %v330 = vadd.f32 %v307, %v314
      %v331 = vadd.f32 %v308, %v314
      %v332 = vmax.f32 %v316, 0.0
      %v333 = vmax.f32 %v317, 0.0
      %v334 = vmax.f32 %v318, 0.0
      %v335 = vmax.f32 %v319, 0.0
      %v336 = vmax.f32 %v320, 0.0
      %v337 = vmax.f32 %v321, 0.0
      %v338 = vmax.f32 %v322, 0.0
      %v339 = vmax.f32 %v323, 0.0
      %v340 = vmax.f32 %v324, 0.0
      %v341 = vmax.f32 %v325, 0.0
      %v342 = vmax.f32 %v326, 0.0
      %v343 = vmax.f32 %v327, 0.0
      %v344 = vmax.f32 %v328, 0.0
      %v345 = vmax.f32 %v329, 0.0
      %v346 = vmax.f32 %v330, 0.0
      %v347 = vmax.f32 %v331, 0.0
      %v348 = vpack.c.bf16 %v333, %v332
      %v349 = vpack.c.bf16 %v335, %v334
      %v350 = vpack.c.bf16 %v337, %v336
      %v351 = vpack.c.bf16 %v339, %v338
      %v352 = vpack.c.bf16 %v341, %v340
      %v353 = vpack.c.bf16 %v343, %v342
      %v354 = vpack.c.bf16 %v345, %v344
      %v355 = vpack.c.bf16 %v347, %v346
      %v364 = vunpack.c.l.b16 %v348
      %v365 = vunpack.c.h.b16 %v348
      %v366 = vunpack.c.l.b16 %v349
      %v367 = vunpack.c.h.b16 %v349
      %v368 = vunpack.c.l.b16 %v350
      %v369 = vunpack.c.h.b16 %v350
      %v370 = vunpack.c.l.b16 %v351
      %v371 = vunpack.c.h.b16 %v351
      %v372 = vunpack.c.l.b16 %v352
      %v373 = vunpack.c.h.b16 %v352
      %v374 = vunpack.c.l.b16 %v353
      %v375 = vunpack.c.h.b16 %v353
      %v376 = vunpack.c.l.b16 %v354
      %v377 = vunpack.c.h.b16 %v354
      %v378 = vunpack.c.l.b16 %v355
      %v379 = vunpack.c.h.b16 %v355
      %v380 = vpack.c.b16 %v364, %v364
      %v381 = vpack.c.b16 %v365, %v365
      %v382 = vpack.c.b16 %v366, %v366
      %v383 = vpack.c.b16 %v367, %v367
      %v384 = vpack.c.b16 %v368, %v368
      %v385 = vpack.c.b16 %v369, %v369
      %v386 = vpack.c.b16 %v370, %v370
      %v387 = vpack.c.b16 %v371, %v371
      %v388 = vpack.c.b16 %v372, %v372
      %v389 = vpack.c.b16 %v373, %v373
      %v390 = vpack.c.b16 %v374, %v374
      %v391 = vpack.c.b16 %v375, %v375
      %v392 = vpack.c.b16 %v376, %v376
      %v393 = vpack.c.b16 %v377, %v377
      %v394 = vpack.c.b16 %v378, %v378
      %v395 = vpack.c.b16 %v379, %v379
      %412 = vst [vmem:[#allocation8] sm:$0xf] %v380
      %413 = vst [vmem:[#allocation8 + $0x4] sm:$0xf] %v381
      %414 = vst [vmem:[#allocation8 + $0x8] sm:$0xf] %v382
      %415 = vst [vmem:[#allocation8 + $0xc] sm:$0xf] %v383
      %416 = vst [vmem:[#allocation8 + $0x10] sm:$0xf] %v384
      %417 = vst [vmem:[#allocation8 + $0x14] sm:$0xf] %v385
      %418 = vst [vmem:[#allocation8 + $0x18] sm:$0xf] %v386
      %419 = vst [vmem:[#allocation8 + $0x1c] sm:$0xf] %v387
      %420 = vst [vmem:[#allocation8 + $0x20] sm:$0xf] %v388
      %421 = vst [vmem:[#allocation8 + $0x24] sm:$0xf] %v389
      %422 = vst [vmem:[#allocation8 + $0x28] sm:$0xf] %v390
      %423 = vst [vmem:[#allocation8 + $0x2c] sm:$0xf] %v391
      %424 = vst [vmem:[#allocation8 + $0x30] sm:$0xf] %v392
      %425 = vst [vmem:[#allocation8 + $0x34] sm:$0xf] %v393
      %426 = vst [vmem:[#allocation8 + $0x38] sm:$0xf] %v394
      %427 = vst [vmem:[#allocation8 + $0x3c] sm:$0xf] %v395
    $region29: #{tpu_custom_call.1} parent=1 // pred_fallthru
      _
    // Predicated region
    $region30: #{tpu_custom_call.1} parent=1 // pred_check
      _
    $region31: #{tpu_custom_call.1} parent=1 // pred_check_branch
      %429 = sbr.rel (0) target = $region33
    $region32: #{tpu_custom_call.1} parent=1 // pred_region
      %s431 = ssub.s32 1024, 1024
      %432 = vsyncadd [#allocation5], %s431
      %s433 = sshll.u32 [#allocation8], 4
      %s434 = int_to_ptr.vmem [resolvable:$true] %s433
      %439 = dma.vmem_to_hbm [thread:$0]  %s434, 1024, %s3, [#allocation5], 64, 64, 4
    $region33: #{tpu_custom_call.1} parent=1 // pred_fallthru
      _
    // Predicated region
    $region34: #{tpu_custom_call.1} parent=1 // pred_check
      _
    $region35: #{tpu_custom_call.1} parent=1 // pred_check_branch
      %441 = sbr.rel (0) target = $region37
    $region36: #{tpu_custom_call.1} parent=1 // pred_region
      %442 = dma.done [#allocation5], 1024
    $region37: #{tpu_custom_call.1} parent=1 // pred_fallthru
      _
    %443 = vsyncpa [#allocation4], 1
    %444 = vsyncpa [#allocation7], 1
    %445 = vsyncpa [#allocation5], 1

</llo_original>
